<compile_context>
chip_gen: v7x
topology: tpu7x:2x2x1
jax: 0.10.0
libtpu: 0.0.40
codegen_flags: <defaults>
</compile_context>

<pallas_src>
import functools

import jax
import jax.numpy as jnp
from jax.experimental import pallas as pl
from jax.experimental.pallas import tpu as pltpu


def _wsc_kernel(spans_ref, emb_ref, w1_ref, b1_ref, w2_ref, b2_ref, out_ref,
                *, block_b, seq_len):
    """One grid step: BM batch rows -> BM span-mean scores (lane-dense row).

    spans_ref : SMEM (2*B,) int32, [s0, e0, s1, e1, ...]
    emb_ref   : VMEM (BM*S, H) bf16   token-major embeddings for this block
    w1_ref    : VMEM (H, H)  bf16
    b1_ref    : VMEM (1, H)  f32
    w2_ref    : VMEM (1, H)  f32      (w2 transposed to a lane-dense row)
    b2_ref    : VMEM (1, 1)  f32
    out_ref   : VMEM (1, 1, BM) f32   per-step output block
    """
    bi = pl.program_id(0)

    # --- Discriminator hot path: one batched MXU matmul for BM*S tokens. ---
    x = emb_ref[...]                                               # (BM*S, H) bf16
    h = jnp.dot(x, w1_ref[...], preferred_element_type=jnp.float32)
    h = jax.nn.gelu(h + b1_ref[...])                               # (BM*S, H) f32

    # Per-token score head (without b2), vectorized over the whole block:
    # one elementwise mul + lane (XLU) reduce instead of per-row work.
    st = jnp.sum(h * w2_ref[...], axis=1, keepdims=True)           # (BM*S, 1) f32

    # Hoisted loop invariants (JAX does not CSE broadcasts inside the unroll).
    b2v = b2_ref[...]                                              # (1, 1) f32
    tok = jax.lax.broadcasted_iota(jnp.int32, (seq_len, 1), 0)     # (S, 1)
    lane = jax.lax.broadcasted_iota(jnp.int32, (1, block_b), 1)    # (1, BM)

    # Per-row tail: masked (S,1) sublane reduce + scalar math. O(S) VPU work
    # per row vs O(S*H*H) MXU work above, so it stays off the critical path.
    out_row = jnp.zeros((1, block_b), jnp.float32)
    for r in range(block_b):                                       # static unroll
        g = bi * block_b + r                                       # global batch row
        start = spans_ref[2 * g]
        end = spans_ref[2 * g + 1]
        m = ((tok >= start) & (tok < end)).astype(jnp.float32)     # (S, 1)
        st_r = st[r * seq_len:(r + 1) * seq_len, :]                # (S, 1) static slice
        num = jnp.sum(st_r * m, keepdims=True)                     # (1, 1) masked sum
        den = (end - start).astype(jnp.float32)                    # scalar from SMEM
        # sum_t m_t*(h_t.w2 + b2) / sum_t m_t == (num + den*b2) / den
        # NOTE: empty spans (start == end) give NaN, matching the reference.
        val = (num + den * b2v) / den                              # (1, 1)
        out_row = jnp.where(lane == r, val, out_row)
    out_ref[...] = out_row[None]                                   # (1, 1, BM) store


@functools.partial(jax.jit, static_argnames=("block_b",))
def electra_wsc_forward(x_ids, spans, params, *, block_b=None):
    emb_table = params["emb"]
    w1, b1, w2, b2 = params["w1"], params["b1"], params["w2"], params["b2"]
    B, S = x_ids.shape
    H = emb_table.shape[1]

    if block_b is None:
        block_b = B

    # Pad the batch so block_b divides it; pad spans are [0, 1) (no NaNs).
    pad_b = (-B) % block_b
    Bp = B + pad_b
    nb = Bp // block_b
    spans_i32 = spans.astype(jnp.int32)
    if pad_b:
        x_ids = jnp.concatenate(
            [x_ids, jnp.zeros((pad_b, S), x_ids.dtype)], axis=0)
        spans_i32 = jnp.concatenate(
            [spans_i32, jnp.tile(jnp.array([[0, 1]], jnp.int32), (pad_b, 1))],
            axis=0)

    # (8,128) rule: emb block sublane dim is block_b*S; must be a multiple of 8
    # unless the block covers the full array (nb == 1).
    assert nb == 1 or (block_b * S) % 8 == 0, (
        "block_b * seq_len must be a multiple of 8 (or use block_b = B)")

    # Glue: bf16 embedding gather, flattened token-major so each grid step feeds
    # one (BM*S, H) LHS to the MXU (no in-kernel reshape needed).
    emb = emb_table.astype(jnp.bfloat16)[x_ids].reshape(Bp * S, H)  # (Bp*S, H) bf16
    w1b = w1.astype(jnp.bfloat16)                                   # (H, H) bf16
    b1f = b1.astype(jnp.float32).reshape(1, H)                      # (1, H)
    w2t = w2.astype(jnp.float32).reshape(1, H)                      # (H,1) -> (1,H)
    b2f = b2.astype(jnp.float32).reshape(1, 1)                      # (1, 1)
    spans_flat = spans_i32.reshape(-1)                              # (2*Bp,) for SMEM

    kernel = functools.partial(_wsc_kernel, block_b=block_b, seq_len=S)

    out = pl.pallas_call(
        kernel,
        out_shape=jax.ShapeDtypeStruct((nb, 1, block_b), jnp.float32),
        grid_spec=pltpu.PrefetchScalarGridSpec(
            num_scalar_prefetch=1,                                  # spans -> SMEM
            grid=(nb,),
            in_specs=[
                pl.BlockSpec((block_b * S, H), lambda b, spans: (b, 0)),  # emb tokens
                pl.BlockSpec((H, H), lambda b, spans: (0, 0)),            # W1
                pl.BlockSpec((1, H), lambda b, spans: (0, 0)),            # b1
                pl.BlockSpec((1, H), lambda b, spans: (0, 0)),            # w2^T
                pl.BlockSpec((1, 1), lambda b, spans: (0, 0)),            # b2
            ],
            out_specs=pl.BlockSpec((1, 1, block_b), lambda b, spans: (b, 0, 0)),
        ),
        compiler_params=pltpu.CompilerParams(
            dimension_semantics=("parallel",),                      # megacore on v7x
        ),
    )(spans_flat, emb, w1b, b1f, w2t, b2f)
    return out.reshape(Bp)[:B]


def _reference(x_ids, spans, params):
    """Pure-JAX reference with the same bf16-input / f32-accumulate numerics."""
    S = x_ids.shape[1]
    emb = params["emb"].astype(jnp.bfloat16)[x_ids]                 # (B, S, H) bf16
    w1b = params["w1"].astype(jnp.bfloat16)
    h = jax.nn.gelu(
        jnp.dot(emb, w1b, preferred_element_type=jnp.float32)
        + params["b1"].astype(jnp.float32))
    scores = (jnp.dot(h, params["w2"].astype(jnp.float32))
              + params["b2"].astype(jnp.float32))[..., 0]           # (B, S)
    idx = jnp.arange(S)[None, :]
    mask = ((idx >= spans[:, :1]) & (idx < spans[:, 1:2])).astype(jnp.float32)
    return (scores * mask).sum(-1) / mask.sum(-1)


if __name__ == "__main__":
    B, S, H, VOCAB = 4, 8, 32, 64

    key = jax.random.PRNGKey(0)
    k_emb, k_w1, k_b1, k_w2, k_b2, k_x = jax.random.split(key, 6)

    params = {
        "emb": jax.random.normal(k_emb, (VOCAB, H), jnp.float32) * 0.1,
        "w1": jax.random.normal(k_w1, (H, H), jnp.float32) * 0.1,
        "b1": jax.random.normal(k_b1, (1, H), jnp.float32) * 0.1,
        "w2": jax.random.normal(k_w2, (H, 1), jnp.float32) * 0.1,
        "b2": jax.random.normal(k_b2, (1, 1), jnp.float32) * 0.1,
    }

    x_ids = jax.random.randint(k_x, (B, S), 0, VOCAB, dtype=jnp.int32)
    spans = jnp.array([[1, 4], [2, 7], [0, 5], [3, 8]], dtype=jnp.int32)  # [start, end)

    out = electra_wsc_forward(x_ids, spans, params, block_b=2)   # 2 batch rows / step
    out = jax.block_until_ready(out)

    ref = _reference(x_ids, spans, params)
    assert out.shape == (B,)
    assert jnp.allclose(out, ref, atol=1e-4, rtol=1e-4), (out, ref)

    print("KERNEL_OK")
</pallas_src>

<mosaic_0001>
module attributes {stable_mosaic.version = 11 : i64} {
  func.func @_wsc_kernel(%arg0: i32, %arg1: memref<8xi32, #tpu.memory_space<smem>>, %arg2: memref<16x32xbf16, #tpu.memory_space<vmem>>, %arg3: memref<32x32xbf16, #tpu.memory_space<vmem>>, %arg4: memref<1x32xf32, #tpu.memory_space<vmem>>, %arg5: memref<1x32xf32, #tpu.memory_space<vmem>>, %arg6: memref<1x1xf32, #tpu.memory_space<vmem>>, %arg7: memref<1x1x2xf32, #tpu.memory_space<vmem>>) attributes {dimension_semantics = [#tpu.dimension_semantics<parallel>], iteration_bounds = array<i64: 2>, scalar_prefetch = 1 : i64, scratch_operands = 0 : i64, tpu.core_type = #tpu.core_type<tc>, window_params = [{transform_indices = @transform_0, window_bounds = array<i64: 16, 32>}, {pipeline_mode = #tpu.pipeline_mode<synchronous>, transform_indices = @transform_1, window_bounds = array<i64: 32, 32>}, {pipeline_mode = #tpu.pipeline_mode<synchronous>, transform_indices = @transform_2, window_bounds = array<i64: 1, 32>}, {pipeline_mode = #tpu.pipeline_mode<synchronous>, transform_indices = @transform_3, window_bounds = array<i64: 1, 32>}, {pipeline_mode = #tpu.pipeline_mode<synchronous>, transform_indices = @transform_4, window_bounds = array<i64: 1, 1>}, {transform_indices = @transform_5, window_bounds = array<i64: 1, 1, 2>}]} {
    %c0 = arith.constant 0 : index
    %c0_0 = arith.constant 0 : index
    %0 = vector.load %arg2[%c0, %c0_0] : memref<16x32xbf16, #tpu.memory_space<vmem>>, vector<16x32xbf16>
    %c0_1 = arith.constant 0 : index
    %c0_2 = arith.constant 0 : index
    %1 = vector.load %arg3[%c0_1, %c0_2] : memref<32x32xbf16, #tpu.memory_space<vmem>>, vector<32x32xbf16>
    %cst = arith.constant dense<0.000000e+00> : vector<16x32xf32>
    %2 = tpu.matmul %0, %1, %cst {dimension_numbers = #tpu.dot_dimension_numbers<[1], [0], [0], [1], [0, 0, 1, 1], [], []>} : vector<16x32xbf16>, vector<32x32xbf16>, vector<16x32xf32> -> vector<16x32xf32>
    %c0_3 = arith.constant 0 : index
    %c0_4 = arith.constant 0 : index
    %3 = vector.load %arg4[%c0_3, %c0_4] : memref<1x32xf32, #tpu.memory_space<vmem>>, vector<1x32xf32>
    %4 = vector.broadcast %3 : vector<1x32xf32> to vector<16x32xf32>
    %5 = arith.addf %2, %4 : vector<16x32xf32>
    %6 = arith.mulf %5, %5 : vector<16x32xf32>
    %7 = arith.mulf %5, %6 : vector<16x32xf32>
    %cst_5 = arith.constant 4.471500e-02 : f32
    %8 = vector.broadcast %cst_5 : f32 to vector<16x32xf32>
    %9 = arith.mulf %8, %7 : vector<16x32xf32>
    %10 = arith.addf %5, %9 : vector<16x32xf32>
    %cst_6 = arith.constant 0.797884583 : f32
    %11 = vector.broadcast %cst_6 : f32 to vector<16x32xf32>
    %12 = arith.mulf %11, %10 : vector<16x32xf32>
    %13 = math.tanh %12 : vector<16x32xf32>
    %cst_7 = arith.constant 1.000000e+00 : f32
    %14 = vector.broadcast %cst_7 : f32 to vector<16x32xf32>
    %15 = arith.addf %14, %13 : vector<16x32xf32>
    %cst_8 = arith.constant 5.000000e-01 : f32
    %16 = vector.broadcast %cst_8 : f32 to vector<16x32xf32>
    %17 = arith.mulf %16, %15 : vector<16x32xf32>
    %18 = arith.mulf %5, %17 : vector<16x32xf32>
    %c0_9 = arith.constant 0 : index
    %c0_10 = arith.constant 0 : index
    %19 = vector.load %arg5[%c0_9, %c0_10] : memref<1x32xf32, #tpu.memory_space<vmem>>, vector<1x32xf32>
    %20 = vector.broadcast %19 : vector<1x32xf32> to vector<16x32xf32>
    %21 = arith.mulf %18, %20 : vector<16x32xf32>
    %cst_11 = arith.constant dense<0.000000e+00> : vector<16xf32>
    %22 = vector.multi_reduction <add>, %21, %cst_11 [1] : vector<16x32xf32> to vector<16xf32>
    %23 = vector.shape_cast %22 : vector<16xf32> to vector<16x1xf32>
    %c0_12 = arith.constant 0 : index
    %c0_13 = arith.constant 0 : index
    %24 = vector.load %arg6[%c0_12, %c0_13] : memref<1x1xf32, #tpu.memory_space<vmem>>, vector<1x1xf32>
    %25 = tpu.iota {dimensions = array<i32: 0>} : vector<8x1xi32>
    %26 = tpu.iota {dimensions = array<i32: 1>} : vector<1x2xi32>
    %cst_14 = arith.constant 0.000000e+00 : f32
    %27 = vector.broadcast %cst_14 : f32 to vector<1x2xf32>
    %c2_i32 = arith.constant 2 : i32
    %28 = arith.muli %arg0, %c2_i32 : i32
    %c0_i32 = arith.constant 0 : i32
    %29 = arith.addi %28, %c0_i32 : i32
    %c2_i32_15 = arith.constant 2 : i32
    %30 = arith.muli %c2_i32_15, %29 : i32
    %31 = arith.index_cast %30 : i32 to index
    %32 = memref.load %arg1[%31] : memref<8xi32, #tpu.memory_space<smem>>
    %c2_i32_16 = arith.constant 2 : i32
    %33 = arith.muli %c2_i32_16, %29 : i32
    %c1_i32 = arith.constant 1 : i32
    %34 = arith.addi %33, %c1_i32 : i32
    %35 = arith.index_cast %34 : i32 to index
    %36 = memref.load %arg1[%35] : memref<8xi32, #tpu.memory_space<smem>>
    %37 = vector.broadcast %32 : i32 to vector<8x1xi32>
    %38 = arith.cmpi sge, %25, %37 : vector<8x1xi32>
    %39 = vector.broadcast %36 : i32 to vector<8x1xi32>
    %40 = arith.cmpi slt, %25, %39 : vector<8x1xi32>
    %41 = arith.andi %38, %40 : vector<8x1xi1>
    %42 = arith.extui %41 : vector<8x1xi1> to vector<8x1xi32>
    %43 = arith.sitofp %42 : vector<8x1xi32> to vector<8x1xf32>
    %44 = vector.extract_strided_slice %23 {offsets = [0, 0], sizes = [8, 1], strides = [1, 1]} : vector<16x1xf32> to vector<8x1xf32>
    %45 = arith.mulf %44, %43 : vector<8x1xf32>
    %46 = vector.shape_cast %45 : vector<8x1xf32> to vector<1x8x1xf32>
    %cst_17 = arith.constant dense<0.000000e+00> : vector<1xf32>
    %47 = vector.multi_reduction <add>, %46, %cst_17 [1, 2] : vector<1x8x1xf32> to vector<1xf32>
    %48 = vector.shape_cast %47 : vector<1xf32> to vector<1x1x1xf32>
    %49 = vector.extract %48[0, 0, 0] : f32 from vector<1x1x1xf32>
    %50 = vector.broadcast %49 : f32 to vector<1x1xf32>
    %51 = arith.subi %36, %32 : i32
    %52 = arith.sitofp %51 : i32 to f32
    %53 = vector.broadcast %52 : f32 to vector<1x1xf32>
    %54 = arith.mulf %53, %24 : vector<1x1xf32>
    %55 = arith.addf %50, %54 : vector<1x1xf32>
    %56 = vector.broadcast %52 : f32 to vector<1x1xf32>
    %57 = arith.divf %55, %56 : vector<1x1xf32>
    %c0_i32_18 = arith.constant 0 : i32
    %58 = vector.broadcast %c0_i32_18 : i32 to vector<1x2xi32>
    %59 = arith.cmpi eq, %26, %58 : vector<1x2xi32>
    %60 = vector.shape_cast %57 : vector<1x1xf32> to vector<1x1xf32>
    %61 = vector.broadcast %60 : vector<1x1xf32> to vector<1x2xf32>
    %62 = arith.select %59, %61, %27 : vector<1x2xi1>, vector<1x2xf32>
    %c2_i32_19 = arith.constant 2 : i32
    %63 = arith.muli %arg0, %c2_i32_19 : i32
    %c1_i32_20 = arith.constant 1 : i32
    %64 = arith.addi %63, %c1_i32_20 : i32
    %c2_i32_21 = arith.constant 2 : i32
    %65 = arith.muli %c2_i32_21, %64 : i32
    %66 = arith.index_cast %65 : i32 to index
    %67 = memref.load %arg1[%66] : memref<8xi32, #tpu.memory_space<smem>>
    %c2_i32_22 = arith.constant 2 : i32
    %68 = arith.muli %c2_i32_22, %64 : i32
    %c1_i32_23 = arith.constant 1 : i32
    %69 = arith.addi %68, %c1_i32_23 : i32
    %70 = arith.index_cast %69 : i32 to index
    %71 = memref.load %arg1[%70] : memref<8xi32, #tpu.memory_space<smem>>
    %72 = vector.broadcast %67 : i32 to vector<8x1xi32>
    %73 = arith.cmpi sge, %25, %72 : vector<8x1xi32>
    %74 = vector.broadcast %71 : i32 to vector<8x1xi32>
    %75 = arith.cmpi slt, %25, %74 : vector<8x1xi32>
    %76 = arith.andi %73, %75 : vector<8x1xi1>
    %77 = arith.extui %76 : vector<8x1xi1> to vector<8x1xi32>
    %78 = arith.sitofp %77 : vector<8x1xi32> to vector<8x1xf32>
    %79 = vector.extract_strided_slice %23 {offsets = [8, 0], sizes = [8, 1], strides = [1, 1]} : vector<16x1xf32> to vector<8x1xf32>
    %80 = arith.mulf %79, %78 : vector<8x1xf32>
    %81 = vector.shape_cast %80 : vector<8x1xf32> to vector<1x8x1xf32>
    %cst_24 = arith.constant dense<0.000000e+00> : vector<1xf32>
    %82 = vector.multi_reduction <add>, %81, %cst_24 [1, 2] : vector<1x8x1xf32> to vector<1xf32>
    %83 = vector.shape_cast %82 : vector<1xf32> to vector<1x1x1xf32>
    %84 = vector.extract %83[0, 0, 0] : f32 from vector<1x1x1xf32>
    %85 = vector.broadcast %84 : f32 to vector<1x1xf32>
    %86 = arith.subi %71, %67 : i32
    %87 = arith.sitofp %86 : i32 to f32
    %88 = vector.broadcast %87 : f32 to vector<1x1xf32>
    %89 = arith.mulf %88, %24 : vector<1x1xf32>
    %90 = arith.addf %85, %89 : vector<1x1xf32>
    %91 = vector.broadcast %87 : f32 to vector<1x1xf32>
    %92 = arith.divf %90, %91 : vector<1x1xf32>
    %c1_i32_25 = arith.constant 1 : i32
    %93 = vector.broadcast %c1_i32_25 : i32 to vector<1x2xi32>
    %94 = arith.cmpi eq, %26, %93 : vector<1x2xi32>
    %95 = vector.shape_cast %92 : vector<1x1xf32> to vector<1x1xf32>
    %96 = vector.broadcast %95 : vector<1x1xf32> to vector<1x2xf32>
    %97 = arith.select %94, %96, %62 : vector<1x2xi1>, vector<1x2xf32>
    %98 = vector.shape_cast %97 : vector<1x2xf32> to vector<1x1x2xf32>
    %c0_26 = arith.constant 0 : index
    %c0_27 = arith.constant 0 : index
    %c0_28 = arith.constant 0 : index
    %99 = vector.load %arg7[%c0_26, %c0_27, %c0_28] : memref<1x1x2xf32, #tpu.memory_space<vmem>>, vector<1x1x2xf32>
    tpu.vector_store %arg7[%c0_26, %c0_27, %c0_28], %98 {strides = array<i32>} : memref<1x1x2xf32, #tpu.memory_space<vmem>>, vector<1x1x2xf32>,
    return
  }
  func.func @transform_0(%arg0: i32, %arg1: memref<8xi32, #tpu.memory_space<smem>>) -> (i32, i32) {
    %c0_i32 = arith.constant 0 : i32
    %c0_i32_0 = arith.constant 0 : i32
    return %arg0, %c0_i32 : i32, i32
  }
  func.func @transform_1(%arg0: i32, %arg1: memref<8xi32, #tpu.memory_space<smem>>) -> (i32, i32) {
    %c0_i32 = arith.constant 0 : i32
    %c0_i32_0 = arith.constant 0 : i32
    %c0_i32_1 = arith.constant 0 : i32
    return %c0_i32, %c0_i32_0 : i32, i32
  }
  func.func @transform_2(%arg0: i32, %arg1: memref<8xi32, #tpu.memory_space<smem>>) -> (i32, i32) {
    %c0_i32 = arith.constant 0 : i32
    %c0_i32_0 = arith.constant 0 : i32
    %c0_i32_1 = arith.constant 0 : i32
    return %c0_i32, %c0_i32_0 : i32, i32
  }
  func.func @transform_3(%arg0: i32, %arg1: memref<8xi32, #tpu.memory_space<smem>>) -> (i32, i32) {
    %c0_i32 = arith.constant 0 : i32
    %c0_i32_0 = arith.constant 0 : i32
    %c0_i32_1 = arith.constant 0 : i32
    return %c0_i32, %c0_i32_0 : i32, i32
  }
  func.func @transform_4(%arg0: i32, %arg1: memref<8xi32, #tpu.memory_space<smem>>) -> (i32, i32) {
    %c0_i32 = arith.constant 0 : i32
    %c0_i32_0 = arith.constant 0 : i32
    %c0_i32_1 = arith.constant 0 : i32
    return %c0_i32, %c0_i32_0 : i32, i32
  }
  func.func @transform_5(%arg0: i32, %arg1: memref<8xi32, #tpu.memory_space<smem>>) -> (i32, i32, i32) {
    %c0_i32 = arith.constant 0 : i32
    %c0_i32_0 = arith.constant 0 : i32
    %c0_i32_1 = arith.constant 0 : i32
    return %arg0, %c0_i32, %c0_i32_0 : i32, i32, i32
  }
}

</mosaic_0001>

<llo_original>
// kernel: electra_wsc_forward.1
$region0: #{electra_wsc_forward.1}
  #allocation0 [shape = 'u32[]', space=smem, size = 0x4, offset = 0x4, fixed_abs, tag = 'smem constant byte address 0x4 - core index']
  #allocation1 [shape = 'u32[144,128]{1,0:T(1,128)}', space=vmem, size = 0x12000, scoped, tag = 'internal scratch']
  #allocation2 [shape = 's32[1]{0}', space=sflag, size = 0x4, scoped, tag = 'scoped memory for electra_wsc_forward.1']
  #allocation3 [shape = 'u8[512]{0}', space=smem, size = 0x200, scoped, tag = 'prefetched SMEM operand 0']
  #allocation4 [shape = 'f32[1,1]{1,0:T(1,128)S(1)}', space=vmem, size = 0x200, scoped, tag = 'scoped memory for electra_wsc_forward.1']
  %s0 = inlined_call_operand.vmem [shape: s32[8], index: 0, kind: input, shape index: {}]
  %s1 = inlined_call_operand.vmem [shape: bf16[32,32], index: 1, kind: input, shape index: {}]
  %s2 = inlined_call_operand.vmem [shape: bf16[32,32], index: 2, kind: input, shape index: {}]
  %s3 = inlined_call_operand.vmem [shape: f32[1,32], index: 3, kind: input, shape index: {}]
  %s4 = inlined_call_operand.vmem [shape: f32[1,32], index: 4, kind: input, shape index: {}]
  %s5 = inlined_call_operand.<no memory space> [shape: f32[1,1], index: 5, kind: input, shape index: {}]
  %s6 = inlined_call_operand.vmem [shape: f32[2,1,2], index: 6, kind: output, shape index: {}]
  %s7 = sld [smem:[#allocation0]]
  $region53: #{electra_wsc_forward.1} parent=0
    _
  %s9 = ssub.s32 1, %s7
  %s10 = scalar_select 0, %s9, %s7
  %s11 = sshll.u32 %s0, 4
  %s12 = int_to_ptr.vmem [resolvable:$true] %s11
  %14 = dma.vmem_to_smem %s12, 16, [#allocation3], [#allocation2]
  %v15 = vstv %s5
  %16 = vst [vmem:[#allocation4] sm:$0x1] %v15
  %17 = dma.done [#allocation2], 16
  %18 = sfence
  loop: start=0, step=1, limit=4
  $region2: #{electra_wsc_forward.1} parent=0 // loop_pre_header
    _
  $region3: #{electra_wsc_forward.1} parent=0 // loop_header
    %s20 = sphi 0, %s24
    %p21 = scmp.ge.s32.totalorder %s20, 4
    %s30 = sphi 0, %s32
    %s33 = sphi 0, %s30
    %s34 = sphi 0, %s33
    %s50 = sphi 0, %s34
    %s54 = sphi 0, %s54
    %s56 = sphi 0, %s54
    %s57 = sphi 0, %s56
    %s71 = sphi 0, %s57
    %s75 = sphi 0, %s75
    %s77 = sphi 0, %s75
    %s78 = sphi 0, %s77
    %s92 = sphi 0, %s78
    %s96 = sphi 0, %s96
    %s98 = sphi 0, %s96
    %s99 = sphi 0, %s98
    %s113 = sphi 0, %s99
    %s117 = sphi 0, %s117
    %s119 = sphi 0, %s117
    %s120 = sphi 0, %s119
    %s134 = sphi 0, %s120
    %s140 = sphi 0, %s142
    %s143 = sphi 0, %s140
    %s144 = sphi 0, %s143
    %s160 = sphi 0, %s144
  $region4: #{electra_wsc_forward.1} parent=0 // loop_header_branch
    %23 = sbr.rel (%p21) target = $region8
  $region5: #{electra_wsc_forward.1} parent=0 // loop_body
    %s25 = ssub.s32 %s20, 1
    %s26 = ssub.s32 %s20, 2
    %s27 = sadd.s32 %s20, 1
    %s28 = ssub.s32 %s20, %s27
    %p29 = scmp.eq.s32.totalorder %s28, 0
    %s31 = sadd.s32 %s30, 1
    %s32 = scalar_select %p29, %s30, %s31
    %p35 = pneg %p29
    %p36 = scmp.eq.s32.totalorder %s20, 1
    %p37 = por %p35, %p36
    %p38 = scmp.ne.s32.totalorder %s30, %s33
    %p39 = scmp.eq.s32.totalorder %s20, 0
    %p40 = por %p38, %p39
    %p41 = scmp.ne.s32.totalorder %s30, %s33
    %p42 = scmp.eq.s32.totalorder %s25, 1
    %p43 = por %p41, %p42
    %p44 = scmp.ne.s32.totalorder %s33, %s34
    %p45 = scmp.eq.s32.totalorder %s25, 0
    %p46 = por %p44, %p45
    %p47 = scmp.ne.s32.totalorder %s33, %s34
    %p48 = scmp.eq.s32.totalorder %s26, 1
    %p49 = por %p47, %p48
    %p51 = scmp.ne.s32.totalorder %s34, %s50
    %p52 = scmp.eq.s32.totalorder %s26, 0
    %p53 = por %p51, %p52
    %s55 = sadd.s32 %s54, 1
    %p58 = scmp.eq.s32.totalorder %s20, 1
    %p59 = scmp.ne.s32.totalorder %s54, %s56
    %p60 = scmp.eq.s32.totalorder %s20, 0
    %p61 = por %p59, %p60
    %p62 = scmp.ne.s32.totalorder %s54, %s56
    %p63 = scmp.eq.s32.totalorder %s25, 1
    %p64 = por %p62, %p63
    %p65 = scmp.ne.s32.totalorder %s56, %s57
    %p66 = scmp.eq.s32.totalorder %s25, 0
    %p67 = por %p65, %p66
    %p68 = scmp.ne.s32.totalorder %s56, %s57
    %p69 = scmp.eq.s32.totalorder %s26, 1
    %p70 = por %p68, %p69
    %p72 = scmp.ne.s32.totalorder %s57, %s71
    %p73 = scmp.eq.s32.totalorder %s26, 0
    %p74 = por %p72, %p73
    %s76 = sadd.s32 %s75, 1
    %p79 = scmp.eq.s32.totalorder %s20, 1
    %p80 = scmp.ne.s32.totalorder %s75, %s77
    %p81 = scmp.eq.s32.totalorder %s20, 0
    %p82 = por %p80, %p81
    %p83 = scmp.ne.s32.totalorder %s75, %s77
    %p84 = scmp.eq.s32.totalorder %s25, 1
    %p85 = por %p83, %p84
    %p86 = scmp.ne.s32.totalorder %s77, %s78
    %p87 = scmp.eq.s32.totalorder %s25, 0
    %p88 = por %p86, %p87
    %p89 = scmp.ne.s32.totalorder %s77, %s78
    %p90 = scmp.eq.s32.totalorder %s26, 1
    %p91 = por %p89, %p90
    %p93 = scmp.ne.s32.totalorder %s78, %s92
    %p94 = scmp.eq.s32.totalorder %s26, 0
    %p95 = por %p93, %p94
    %s97 = sadd.s32 %s96, 1
    %p100 = scmp.eq.s32.totalorder %s20, 1
    %p101 = scmp.ne.s32.totalorder %s96, %s98
    %p102 = scmp.eq.s32.totalorder %s20, 0
    %p103 = por %p101, %p102
    %p104 = scmp.ne.s32.totalorder %s96, %s98
    %p105 = scmp.eq.s32.totalorder %s25, 1
    %p106 = por %p104, %p105
    %p107 = scmp.ne.s32.totalorder %s98, %s99
    %p108 = scmp.eq.s32.totalorder %s25, 0
    %p109 = por %p107, %p108
    %p110 = scmp.ne.s32.totalorder %s98, %s99
    %p111 = scmp.eq.s32.totalorder %s26, 1
    %p112 = por %p110, %p111
    %p114 = scmp.ne.s32.totalorder %s99, %s113
    %p115 = scmp.eq.s32.totalorder %s26, 0
    %p116 = por %p114, %p115
    %s118 = sadd.s32 %s117, 1
    %p121 = scmp.eq.s32.totalorder %s20, 1
    %p122 = scmp.ne.s32.totalorder %s117, %s119
    %p123 = scmp.eq.s32.totalorder %s20, 0
    %p124 = por %p122, %p123
    %p125 = scmp.ne.s32.totalorder %s117, %s119
    %p126 = scmp.eq.s32.totalorder %s25, 1
    %p127 = por %p125, %p126
    %p128 = scmp.ne.s32.totalorder %s119, %s120
    %p129 = scmp.eq.s32.totalorder %s25, 0
    %p130 = por %p128, %p129
    %p131 = scmp.ne.s32.totalorder %s119, %s120
    %p132 = scmp.eq.s32.totalorder %s26, 1
    %p133 = por %p131, %p132
    %p135 = scmp.ne.s32.totalorder %s120, %s134
    %p136 = scmp.eq.s32.totalorder %s26, 0
    %p137 = por %p135, %p136
    %s138 = ssub.s32 %s20, %s27
    %p139 = scmp.eq.s32.totalorder %s138, 0
    %s141 = sadd.s32 %s140, 1
    %s142 = scalar_select %p139, %s140, %s141
    %p145 = pneg %p139
    %p146 = scmp.eq.s32.totalorder %s20, 1
    %p147 = por %p145, %p146
    %p148 = scmp.ne.s32.totalorder %s140, %s143
    %p149 = scmp.eq.s32.totalorder %s20, 0
    %p150 = por %p148, %p149
    %p151 = scmp.ne.s32.totalorder %s140, %s143
    %p152 = scmp.eq.s32.totalorder %s25, 1
    %p153 = por %p151, %p152
    %p154 = scmp.ne.s32.totalorder %s143, %s144
    %p155 = scmp.eq.s32.totalorder %s25, 0
    %p156 = por %p154, %p155
    %p157 = scmp.ne.s32.totalorder %s143, %s144
    %p158 = scmp.eq.s32.totalorder %s26, 1
    %p159 = por %p157, %p158
    %p161 = scmp.ne.s32.totalorder %s144, %s160
    %p162 = scmp.eq.s32.totalorder %s26, 0
    %p163 = por %p161, %p162
    %p164 = scmp.le.s32.totalorder 1, %s20
    %p165 = scmp.lt.s32.totalorder %s20, 3
    %p166 = pnand %p164, %p165
    %p167 = pneg %p166
    // Predicated region
    $region9: #{electra_wsc_forward.1} parent=5 // pred_check
      _
    $region10: #{electra_wsc_forward.1} parent=5 // pred_check_branch
      %169 = sbr.rel (%p166) target = $region12
    $region11: #{electra_wsc_forward.1} parent=5 // pred_region
      %s170 = ssub.s32 %s20, 1
      // Predicated region
      $region13: #{electra_wsc_forward.1} parent=11 // pred_check
        %p171 = pneg %p67
      $region14: #{electra_wsc_forward.1} parent=11 // pred_check_branch
        %173 = sbr.rel (%p171) target = $region16
      $region15: #{electra_wsc_forward.1} parent=11 // pred_region
        _
      $region16: #{electra_wsc_forward.1} parent=11 // pred_fallthru
        _
      // Predicated region
      $region17: #{electra_wsc_forward.1} parent=11 // pred_check
        %p174 = pneg %p88
      $region18: #{electra_wsc_forward.1} parent=11 // pred_check_branch
        %176 = sbr.rel (%p174) target = $region20
      $region19: #{electra_wsc_forward.1} parent=11 // pred_region
        _
      $region20: #{electra_wsc_forward.1} parent=11 // pred_fallthru
        _
      // Predicated region
      $region21: #{electra_wsc_forward.1} parent=11 // pred_check
        %p177 = pneg %p109
      $region22: #{electra_wsc_forward.1} parent=11 // pred_check_branch
        %179 = sbr.rel (%p177) target = $region24
      $region23: #{electra_wsc_forward.1} parent=11 // pred_region
        _
      $region24: #{electra_wsc_forward.1} parent=11 // pred_fallthru
        _
      // Predicated region
      $region25: #{electra_wsc_forward.1} parent=11 // pred_check
        %p180 = pneg %p130
      $region26: #{electra_wsc_forward.1} parent=11 // pred_check_branch
        %182 = sbr.rel (%p180) target = $region28
      $region27: #{electra_wsc_forward.1} parent=11 // pred_region
        _
      $region28: #{electra_wsc_forward.1} parent=11 // pred_fallthru
        _
    $region12: #{electra_wsc_forward.1} parent=5 // pred_fallthru
      _
    %p183 = scmp.lt.s32.totalorder %s20, 2
    // Predicated region
    $region29: #{electra_wsc_forward.1} parent=5 // pred_check
      %p184 = pneg %p183
    $region30: #{electra_wsc_forward.1} parent=5 // pred_check_branch
      %186 = sbr.rel (%p184) target = $region32
    $region31: #{electra_wsc_forward.1} parent=5 // pred_region
      // Predicated region
      $region33: #{electra_wsc_forward.1} parent=31 // pred_check
        %p187 = pneg %p40
      $region34: #{electra_wsc_forward.1} parent=31 // pred_check_branch
        %189 = sbr.rel (%p187) target = $region36
      $region35: #{electra_wsc_forward.1} parent=31 // pred_region
        %s190 = smul.u32 2, %s20
        %p191 = scmp.lt.s32.totalorder %s190, 3
        %s192 = scalar_select %p191, %s190, 3
        %s193 = smul.addr %s192, 4
        %s194 = scalar_lea.vmem %s1, %s193
        %s195 = smul.u32 2, %s20
      $region36: #{electra_wsc_forward.1} parent=31 // pred_fallthru
        _
    $region32: #{electra_wsc_forward.1} parent=5 // pred_fallthru
      _
    %p196 = scmp.le.s32.totalorder 1, %s20
    %p197 = scmp.lt.s32.totalorder %s20, 3
    %p198 = pnand %p196, %p197
    %p199 = pneg %p198
    // Predicated region
    $region37: #{electra_wsc_forward.1} parent=5 // pred_check
      _
    $region38: #{electra_wsc_forward.1} parent=5 // pred_check_branch
      %201 = sbr.rel (%p198) target = $region40
    $region39: #{electra_wsc_forward.1} parent=5 // pred_region
      %s202 = ssub.s32 %s20, 1
      %s203 = smul.u32 2, %s25
      %p204 = scmp.lt.s32.totalorder %s203, 3
      %s205 = scalar_select %p204, %s203, 3
      %s206 = smul.addr %s205, 4
      %s207 = scalar_lea.vmem %s1, %s206
      %p208 = pneg %p46
      %p209 = pneg %p43
      %p210 = pneg %p67
      %p211 = pneg %p64
      %p212 = pneg %p88
      %p213 = pneg %p85
      %p214 = pneg %p109
      %p215 = pneg %p106
      %p216 = pneg %p130
      %p217 = pneg %p127
      %p218 = pneg %p156
      %p219 = pneg %p153
      %p220 = scmp.lt.s32.totalorder %s25, 1
      %s221 = scalar_select %p220, %s25, 1
      %s222 = scalar_lea.vmem %s6, %s221
      %s223 = smul.u32 2, %s25
      %p224 = scmp.lt.s32.totalorder %s223, 3
      %s225 = scalar_select %p224, %s223, 3
      %s226 = smul.addr %s225, 4
      %s227 = scalar_lea.vmem %s1, %s226
      %s228 = smul.u32 2, %s25
      %p229 = scmp.lt.s32.totalorder %s25, 1
      %s230 = scalar_select %p229, %s25, 1
      %s231 = scalar_lea.vmem %s6, %s230
      %v233 = vld [vmem:[%s227] sm:$0xf]
      %v234 = vld [vmem:[%s227 + $0x4] sm:$0xf]
      %v235 = vld [vmem:[%s2] sm:$0xf]
      %v236 = vld [vmem:[%s2 + $0x4] sm:$0xf]
      %v237 = vld [vmem:[%s2 + $0x8] sm:$0xf]
      %v238 = vld [vmem:[%s2 + $0xc] sm:$0xf]
      %v239 = vld [vmem:[%s3] sm:$0x1]
      %v241 = vlaneseq
      %v242 = vshrl.u32 %v241, 7
      %v243 = vsub.s32 0, %v242
      %v244 = vrot.slane %v239, %v243
      %v248 = vunpack.c.l.b16 %v233
      %v249 = vunpack.c.l.b16 %v234
      %v250 = vpack.c.b16 %v249, %v248
      %v255 = vunpack.c.l.b16 %v235
      %v256 = vunpack.c.l.b16 %v236
      %v257 = vunpack.c.l.b16 %v237
      %v258 = vunpack.c.l.b16 %v238
      %v259 = vpack.c.b16 %v256, %v255
      %v260 = vpack.c.b16 %v258, %v257
      %vm263 = vcmask 261120
      %v265 = vsel %vm263, %v250, 0
      %267 = vmatprep.subr.bf16.mxu0 0
      %268 = vmatpush1.bf16.msra.mxu0 %v259
      %269 = vmatprep.subr.bf16.mxu0 0
      %270 = vmatpush1.bf16.msra.mxu0 %v260
      %271 = vmatprep.subr.bf16.mxu0 0
      %272 = vmatpush1.bf16.msra.mxu0 0
      %273 = vmatprep.subr.bf16.mxu0 0
      %274 = vmatpush1.bf16.msra.mxu0 0
      %275 = vmatprep.subr.bf16.mxu0 0
      %276 = vmatpush1.bf16.msra.mxu0 0
      %277 = vmatprep.subr.bf16.mxu0 0
      %278 = vmatpush1.bf16.msra.mxu0 0
      %279 = vmatprep.subr.bf16.mxu0 0
      %280 = vmatpush1.bf16.msra.mxu0 0
      %281 = vmatprep.subr.bf16.mxu0 0
      %282 = vmatpush1.bf16.msra.mxu0 0
      %283 = vmatprep.subr.bf16.mxu0 0
      %284 = vmatpush1.bf16.msra.mxu0 0
      %285 = vmatprep.subr.bf16.mxu0 0
      %286 = vmatpush1.bf16.msra.mxu0 0
      %287 = vmatprep.subr.bf16.mxu0 0
      %288 = vmatpush1.bf16.msra.mxu0 0
      %289 = vmatprep.subr.bf16.mxu0 0
      %290 = vmatpush1.bf16.msra.mxu0 0
      %291 = vmatprep.subr.bf16.mxu0 0
      %292 = vmatpush1.bf16.msra.mxu0 0
      %293 = vmatprep.subr.bf16.mxu0 0
      %294 = vmatpush1.bf16.msra.mxu0 0
      %295 = vmatprep.subr.bf16.mxu0 0
      %296 = vmatpush1.bf16.msra.mxu0 0
      %297 = vmatprep.subr.bf16.mxu0 0
      %298 = vmatpush1.bf16.msra.mxu0 0
      %299 = vmatprep.mubr.bf16.mxu0 0
      %300 = vmatmul.mubr.bf16.gmra.mrb[0].mxu0 %v265
      %v301 = vpop.f32.mrb[0].mxu0
      %v302 = vadd.f32 %v244, %v301
      %v303 = vpop.f32.mrb[0].mxu0
      %v304 = vpop.f32.mrb[0].mxu0
      %v305 = vadd.f32 %v244, %v304
      %v306 = vpop.f32.mrb[0].mxu0
      %307 = vdwg.mxu0
      %v308 = vmul.f32 %v302, %v302
      %v309 = vmul.f32 %v305, %v305
      %v310 = vmul.f32 %v302, %v308
      %v311 = vmul.f32 %v305, %v309
      %v312 = vmul.f32 %v310, 0.044715
      %v313 = vmul.f32 %v311, 0.044715
      %v314 = vadd.f32 %v302, %v312
      %v315 = vadd.f32 %v305, %v313
      %v316 = vmul.f32 %v314, 0.7978846
      %v317 = vmul.f32 %v315, 0.7978846
      %v318 = vtanh.pop %v316
      %v319 = vtanh.pop %v317
      %v320 = vadd.f32 %v318, 1.0
      %v321 = vadd.f32 %v319, 1.0
      %v322 = vmul.f32 %v320, 0.5
      %v323 = vmul.f32 %v321, 0.5
      %v324 = vmul.f32 %v302, %v322
      %v325 = vmul.f32 %v305, %v323
      %v326 = vld [vmem:[%s4] sm:$0x1]
      %v328 = vlaneseq
      %v329 = vshrl.u32 %v328, 7
      %v330 = vsub.s32 0, %v329
      %v331 = vrot.slane %v326, %v330
      %v333 = vmul.f32 %v324, %v331
      %v334 = vmul.f32 %v325, %v331
      %v335 = vsel %vm263, %v333, 0.0
      %336 = vadd.xlane.f32.xlu0 %v335
      %v337 = vpop.xlane.xlu0 %336
      %v338 = vsel %vm263, %v334, 0.0
      %339 = vadd.xlane.f32.xlu0 %v338
      %v340 = vpop.xlane.xlu0 %339
      %v341 = vld [vmem:[#allocation4] sm:$0x1]
      %v342 = vlaneseq
      %v343 = vshrl.u32 %v342, 7
      %v344 = vlaneseq
      %v345 = vand.u32 %v344, 127
      %s346 = smul.u32 %s25, 4
      %s347 = sld [smem:[#allocation3 + %s346]]
      %s348 = sadd.s32 %s346, 1
      %s349 = sld [smem:[#allocation3 + %s348]]
      %v350 = vstv %s347
      %vm351 = vcmp.ge.s32.totalorder %v343, %v350
      %v352 = vstv %s349
      %vm353 = vcmp.lt.s32.totalorder %v343, %v352
      %vm354 = vmand %vm351, %vm353
      %v355 = vsel %vm354, 1, 0
      %v356 = vcvt.s32.f32 %v355
      %v357 = vmul.f32 %v337, %v356
      %vm358 = vcmask 7168
      %v359 = vsel %vm358, %v357, 0.0
      %360 = vadd.xlane.f32.xlu0 %v359
      %v361 = vpop.xlane.xlu0 %360
      %v362 = vrot.slane %v361, 4
      %v363 = vadd.f32 %v361, %v362
      %v364 = vrot.slane %v363, 2
      %v365 = vadd.f32 %v363, %v364
      %v366 = vrot.slane %v365, 1
      %v367 = vadd.f32 %v365, %v366
      %s368 = vtos %v367
      %v369 = vstv %s368
      %s370 = ssub.s32 %s349, %s347
      %s371 = scvt.s32.f32 %s370
      %v372 = vstv %s371
      %v373 = vmul.f32 %v372, %v341
      %v374 = vadd.f32 %v369, %v373
      %v375 = vrcp.pop %v372
      %v376 = vmul.f32 %v374, %v375
      %vm377 = vcmp.eq.s32.totalorder %v345, 0
      %379 = vset.pattern.permute.xlu0 0
      %380 = vperm.xlu0 %379, %v376
      %v381 = vpop.permute.xlu0 %380
      %v383 = vlaneseq
      %v384 = vshrl.u32 %v383, 7
      %v385 = vsub.s32 0, %v384
      %v386 = vrot.slane %v381, %v385
      %v387 = vsel %vm377, %v386, 0.0
      %s388 = smul.u32 %s25, 2
      %s389 = sadd.s32 %s388, 1
      %s390 = smul.u32 %s389, 2
      %s391 = sld [smem:[#allocation3 + %s390]]
      %s392 = sadd.s32 %s390, 1
      %s393 = sld [smem:[#allocation3 + %s392]]
      %v394 = vstv %s391
      %vm395 = vcmp.ge.s32.totalorder %v343, %v394
      %v396 = vstv %s393
      %vm397 = vcmp.lt.s32.totalorder %v343, %v396
      %vm398 = vmand %vm395, %vm397
      %v399 = vsel %vm398, 1, 0
      %v400 = vcvt.s32.f32 %v399
      %v401 = vmul.f32 %v340, %v400
      %v402 = vsel %vm358, %v401, 0.0
      %403 = vadd.xlane.f32.xlu0 %v402
      %v404 = vpop.xlane.xlu0 %403
      %v405 = vrot.slane %v404, 4
      %v406 = vadd.f32 %v404, %v405
      %v407 = vrot.slane %v406, 2
      %v408 = vadd.f32 %v406, %v407
      %v409 = vrot.slane %v408, 1
      %v410 = vadd.f32 %v408, %v409
      %s411 = vtos %v410
      %v412 = vstv %s411
      %s413 = ssub.s32 %s393, %s391
      %s414 = scvt.s32.f32 %s413
      %v415 = vstv %s414
      %v416 = vmul.f32 %v415, %v341
      %v417 = vadd.f32 %v412, %v416
      %v418 = vrcp.pop %v415
      %v419 = vmul.f32 %v417, %v418
      %vm420 = vcmp.eq.s32.totalorder %v345, 1
      %422 = vset.pattern.permute.xlu0 0
      %423 = vperm.xlu0 %422, %v419
      %v424 = vpop.permute.xlu0 %423
      %v426 = vlaneseq
      %v427 = vshrl.u32 %v426, 7
      %v428 = vsub.s32 0, %v427
      %v429 = vrot.slane %v424, %v428
      %v430 = vsel %vm420, %v429, %v387
      %vm431 = vcmask 8192
      %432 = vst.msk [vmem:[%s231] sm:$0x1] %vm431, %v430
      %p433 = scmp.lt.s32.totalorder %s25, 1
      %s434 = scalar_select %p433, %s25, 1
      %s435 = scalar_lea.vmem %s6, %s434
      // Predicated region
      $region41: #{electra_wsc_forward.1} parent=39 // pred_check
        %p436 = pneg %p153
      $region42: #{electra_wsc_forward.1} parent=39 // pred_check_branch
        %438 = sbr.rel (%p436) target = $region44
      $region43: #{electra_wsc_forward.1} parent=39 // pred_region
        _
      $region44: #{electra_wsc_forward.1} parent=39 // pred_fallthru
        _
    $region40: #{electra_wsc_forward.1} parent=5 // pred_fallthru
      _
    %p439 = scmp.le.s32.totalorder 2, %s20
    // Predicated region
    $region45: #{electra_wsc_forward.1} parent=5 // pred_check
      %p440 = pneg %p439
    $region46: #{electra_wsc_forward.1} parent=5 // pred_check_branch
      %442 = sbr.rel (%p440) target = $region48
    $region47: #{electra_wsc_forward.1} parent=5 // pred_region
      %s443 = ssub.s32 %s20, 2
      // Predicated region
      $region49: #{electra_wsc_forward.1} parent=47 // pred_check
        %p444 = pneg %p159
      $region50: #{electra_wsc_forward.1} parent=47 // pred_check_branch
        %446 = sbr.rel (%p444) target = $region52
      $region51: #{electra_wsc_forward.1} parent=47 // pred_region
        %p447 = scmp.lt.s32.totalorder %s26, 1
        %s448 = scalar_select %p447, %s26, 1
        %s449 = scalar_lea.vmem %s6, %s448
      $region52: #{electra_wsc_forward.1} parent=47 // pred_fallthru
        _
    $region48: #{electra_wsc_forward.1} parent=5 // pred_fallthru
      _
  $region6: #{electra_wsc_forward.1} parent=0 // loop_footer
    %s24 = sadd.s32 1, %s20
  $region7: #{electra_wsc_forward.1} parent=0 // loop_footer_branch
    %19 = sbr.rel target = $region3
  $region8: #{electra_wsc_forward.1} parent=0 // loop_exit
    _

</llo_original>
